<compile_context>
chip_gen: v7x
topology: tpu7x:2x2x1
jax: 0.10.0
libtpu: 0.0.40
codegen_flags: <defaults>
</compile_context>

<pallas_src>
import math

import jax
import jax.numpy as jnp
from jax.experimental import pallas as pl
from jax.experimental.pallas import tpu as pltpu

_LANES = 128
_SUBLANES = 8


def _cdiv(a, b):
    return -(-a // b)


def _round_up(a, b):
    return _cdiv(a, b) * b


def _drop_path_kernel(scale_ref, x_ref, o_ref):
    # scale_ref: (bb, 1, 1) f32 per-sample scale (0.0 or 1/keep_prob).
    # x_ref / o_ref: (bb, tr, cols) in the tensor dtype.
    x = x_ref[...]
    o_ref[...] = x * scale_ref[...].astype(x.dtype)


def drop_path_pallas(x, key, drop_prob, *, training=True,
                     target_block_bytes=2 << 20):
    """DropPath / stochastic depth on TPU. x: [B, ...] -> same shape."""
    if drop_prob == 0.0 or not training:
        # Module's early-return path: identity, no kernel launch.
        return x

    keep_prob = 1.0 - drop_prob
    batch = x.shape[0]
    n = math.prod(x.shape[1:])
    itemsize = x.dtype.itemsize

    # torch: random_tensor = floor(keep_prob + U[0,1))  == Bernoulli(keep_prob).
    keep = jnp.floor(keep_prob + jax.random.uniform(key, (batch,), jnp.float32))
    # Per-sample scale passed as data (not closed over) -> one compiled kernel
    # for every drop_prob in a stochastic-depth schedule.
    scale = (keep / keep_prob).reshape(batch, 1, 1).astype(jnp.float32)

    # ---- lane-dense 3-D view of x, avoiding padding whenever possible --------
    pad = 0
    if n % _LANES == 0:
        rows, cols = n // _LANES, _LANES
    elif n * itemsize <= target_block_bytes:
        # Ragged lane count carried by the (exempt) full-width last dim; the
        # layout masks the lane tail in-kernel instead of pad+slice in HBM.
        rows, cols = 1, n
    else:
        # TODO(synk): large-and-unaligned n; replace pad+slice with an in-kernel
        # masked lane tail to drop the two extra HBM round trips.
        rows, cols = _cdiv(n, _LANES), _LANES
        pad = rows * _LANES - n

    xm = x.reshape(batch, n)
    if pad:
        xm = jnp.pad(xm, ((0, 0), (0, pad)))
    xm = xm.reshape(batch, rows, cols)

    # ---- tile sizes: ~target_block_bytes moved per grid step -----------------
    row_bytes = cols * itemsize
    tr_target = max(_SUBLANES,
                    (target_block_bytes // row_bytes) // _SUBLANES * _SUBLANES)
    tr = min(tr_target, rows)            # full dim, or a multiple of 8
    bb = max(1, min(batch, target_block_bytes // max(1, tr * row_bytes)))

    # Ensure >= 2 blocks on a parallel axis so both v7x TensorCores get work.
    if _cdiv(batch, bb) * _cdiv(rows, tr) == 1:
        if batch > 1:
            bb = _cdiv(batch, 2)
        elif rows > _SUBLANES:
            tr = _round_up(_cdiv(rows, 2), _SUBLANES)

    grid = (_cdiv(batch, bb), _cdiv(rows, tr))

    out = pl.pallas_call(
        _drop_path_kernel,
        out_shape=jax.ShapeDtypeStruct((batch, rows, cols), x.dtype),
        grid=grid,
        in_specs=[
            pl.BlockSpec((bb, 1, 1), lambda i, j: (i, 0, 0)),      # scale
            pl.BlockSpec((bb, tr, cols), lambda i, j: (i, j, 0)),  # x
        ],
        out_specs=pl.BlockSpec((bb, tr, cols), lambda i, j: (i, j, 0)),
        compiler_params=pltpu.CompilerParams(
            dimension_semantics=("parallel", "parallel")),
        cost_estimate=pl.CostEstimate(
            flops=batch * n,
            transcendentals=0,
            bytes_accessed=2 * batch * n * itemsize),
    )(scale, xm)

    if pad:
        out = out.reshape(batch, rows * cols)[:, :n]
    return out.reshape(x.shape)


if __name__ == "__main__":
    # Small shape consistent with the module's typical use: [B, C, H, W].
    B, C, H, W = 2, 4, 16, 16
    drop_prob = 0.25

    key = jax.random.PRNGKey(0)
    kx, kmask = jax.random.split(key)
    x = jax.random.normal(kx, (B, C, H, W), jnp.float32)

    # Training mode: stochastic per-sample drop with 1/keep_prob rescale.
    y = drop_path_pallas(x, kmask, drop_prob, training=True)
    jax.block_until_ready(y)

    # Pure-JAX reference using the identical per-sample mask.
    keep_prob = 1.0 - drop_prob
    keep = jnp.floor(keep_prob + jax.random.uniform(kmask, (B,), jnp.float32))
    ref = x / keep_prob * keep.reshape(B, 1, 1, 1)
    assert y.shape == x.shape
    assert jnp.allclose(y, ref, atol=1e-5, rtol=1e-5)

    # Ragged-lane path (n % 128 != 0) exercised at a small shape as well.
    x2 = jax.random.normal(kx, (2, 3, 5, 7), jnp.float32)   # n = 105
    y2 = drop_path_pallas(x2, kmask, drop_prob, training=True)
    jax.block_until_ready(y2)
    ref2 = x2 / keep_prob * keep.reshape(2, 1, 1, 1)
    assert jnp.allclose(y2, ref2, atol=1e-5, rtol=1e-5)

    # Eval / drop_prob == 0 paths are the identity (module's early return).
    assert jnp.array_equal(drop_path_pallas(x, kmask, drop_prob, training=False), x)
    assert jnp.array_equal(drop_path_pallas(x, kmask, 0.0, training=True), x)

    print("KERNEL_OK")
</pallas_src>

<mosaic_0001>
module attributes {stable_mosaic.version = 11 : i64} {
  func.func @_drop_path_kernel(%arg0: i32, %arg1: i32, %arg2: memref<1x1x1xf32, #tpu.memory_space<vmem>>, %arg3: memref<1x8x128xf32, #tpu.memory_space<vmem>>, %arg4: memref<1x8x128xf32, #tpu.memory_space<vmem>>) attributes {dimension_semantics = [#tpu.dimension_semantics<parallel>, #tpu.dimension_semantics<parallel>], iteration_bounds = array<i64: 2, 1>, scalar_prefetch = 0 : i64, scratch_operands = 0 : i64, tpu.core_type = #tpu.core_type<tc>, window_params = [{transform_indices = @transform_0, window_bounds = array<i64: 1, 1, 1>}, {transform_indices = @transform_1, window_bounds = array<i64: 1, 8, 128>}, {transform_indices = @transform_2, window_bounds = array<i64: 1, 8, 128>}]} {
    %c0 = arith.constant 0 : index
    %c0_0 = arith.constant 0 : index
    %c0_1 = arith.constant 0 : index
    %0 = vector.load %arg3[%c0, %c0_0, %c0_1] : memref<1x8x128xf32, #tpu.memory_space<vmem>>, vector<1x8x128xf32>
    %c0_2 = arith.constant 0 : index
    %c0_3 = arith.constant 0 : index
    %c0_4 = arith.constant 0 : index
    %1 = vector.load %arg2[%c0_2, %c0_3, %c0_4] : memref<1x1x1xf32, #tpu.memory_space<vmem>>, vector<1x1x1xf32>
    %2 = vector.broadcast %1 : vector<1x1x1xf32> to vector<1x8x128xf32>
    %3 = arith.mulf %0, %2 : vector<1x8x128xf32>
    %c0_5 = arith.constant 0 : index
    %c0_6 = arith.constant 0 : index
    %c0_7 = arith.constant 0 : index
    %4 = vector.load %arg4[%c0_5, %c0_6, %c0_7] : memref<1x8x128xf32, #tpu.memory_space<vmem>>, vector<1x8x128xf32>
    tpu.vector_store %arg4[%c0_5, %c0_6, %c0_7], %3 {strides = array<i32>} : memref<1x8x128xf32, #tpu.memory_space<vmem>>, vector<1x8x128xf32>,
    return
  }
  func.func @transform_0(%arg0: i32, %arg1: i32) -> (i32, i32, i32) {
    %c0_i32 = arith.constant 0 : i32
    %c0_i32_0 = arith.constant 0 : i32
    %c0_i32_1 = arith.constant 0 : i32
    return %arg0, %c0_i32, %c0_i32_0 : i32, i32, i32
  }
  func.func @transform_1(%arg0: i32, %arg1: i32) -> (i32, i32, i32) {
    %c0_i32 = arith.constant 0 : i32
    %c0_i32_0 = arith.constant 0 : i32
    return %arg0, %arg1, %c0_i32 : i32, i32, i32
  }
  func.func @transform_2(%arg0: i32, %arg1: i32) -> (i32, i32, i32) {
    %c0_i32 = arith.constant 0 : i32
    %c0_i32_0 = arith.constant 0 : i32
    return %arg0, %arg1, %c0_i32 : i32, i32, i32
  }
}

</mosaic_0001>

<llo_original>
// kernel: tpu_custom_call.1
$region0: #{tpu_custom_call.1}
  #allocation0 [shape = 'u32[]', space=smem, size = 0x4, offset = 0x4, fixed_abs, tag = 'smem constant byte address 0x4 - core index']
  #allocation1 [shape = 'u32[144,128]{1,0:T(1,128)}', space=vmem, size = 0x12000, scoped, tag = 'internal scratch']
  %s0 = inlined_call_operand.vmem [shape: f32[2,1,1], index: 0, kind: input, shape index: {}]
  %s1 = inlined_call_operand.hbm [shape: f32[2,8,128], index: 1, kind: input, shape index: {}]
  %s2 = inlined_call_operand.hbm [shape: f32[2,8,128], index: 2, kind: output, shape index: {}]
  %s3 = sld [smem:[#allocation0]]
  $region45: #{tpu_custom_call.1} parent=0
    _
  %s5 = ssub.s32 1, %s3
  %s6 = scalar_select 0, %s5, %s3
  $region1: #{tpu_custom_call.1} parent=0
    #allocation2 [shape = 'u8[8192]{0}', space=vmem, size = 0x2000, scoped, tag = 'input window, operand 1']
    #allocation3 [shape = 's32[2]{0}', space=sflag, size = 0x8, scoped, tag = 'scoped memory for tpu_custom_call.1']
    #allocation4 [shape = 's32[2]{0}', space=sflag, size = 0x8, scoped, tag = 'scoped memory for tpu_custom_call.1']
    #allocation5 [shape = 'u8[8192]{0}', space=vmem, size = 0x2000, scoped, tag = 'output window, operand 0']
    %7 = vsyncpa [#allocation3], 0
    %s8 = scalar_lea.sflag [#allocation3], 1
    %9 = vsyncpa %s8, 0
    %10 = vsyncpa [#allocation4], 0
    %s11 = scalar_lea.sflag [#allocation4], 1
    %12 = vsyncpa %s11, 0
    loop: start=0, step=1, limit=4
    $region2: #{tpu_custom_call.1} parent=1 // loop_pre_header
      _
    $region3: #{tpu_custom_call.1} parent=1 // loop_header
      %s14 = sphi 0, %s18
      %p15 = scmp.ge.s32.totalorder %s14, 4
      %s21 = sphi 0, %s33
      %s22 = sphi 0, %s29
      %s23 = sphi 0, %s21
      %s24 = sphi 0, %s22
      %s25 = sphi 0, %s23
      %s26 = sphi 0, %s24
      %s36 = sphi 0, %s38
      %s39 = sphi 0, %s36
      %s40 = sphi 0, %s39
      %s56 = sphi 0, %s40
      %s64 = sphi 0, %s66
      %s67 = sphi 0, %s64
      %s68 = sphi 0, %s67
      %s84 = sphi 0, %s68
      %s92 = sphi 0, %s94
      %s95 = sphi 0, %s92
      %s96 = sphi 0, %s95
      %s112 = sphi 0, %s96
    $region4: #{tpu_custom_call.1} parent=1 // loop_header_branch
      %17 = sbr.rel (%p15) target = $region8
    $region5: #{tpu_custom_call.1} parent=1 // loop_body
      %s19 = ssub.s32 %s14, 1
      %s20 = ssub.s32 %s14, 2
      %s27 = sadd.s32 1, %s22
      %p28 = scmp.ge.s32.totalorder %s27, 1
      %s29 = scalar_select %p28, 0, %s27
      %s30 = sadd.s32 1, %s21
      %s31 = scalar_select %p28, %s30, %s21
      %p32 = scmp.ge.s32.totalorder %s31, 2
      %s33 = scalar_select %p32, 0, %s31
      %s34 = ssub.s32 %s21, %s33
      %p35 = scmp.eq.s32.totalorder %s34, 0
      %s37 = sadd.s32 %s36, 1
      %s38 = scalar_select %p35, %s36, %s37
      %p41 = pneg %p35
      %p42 = scmp.eq.s32.totalorder %s14, 1
      %p43 = por %p41, %p42
      %p44 = scmp.ne.s32.totalorder %s36, %s39
      %p45 = scmp.eq.s32.totalorder %s14, 0
      %p46 = por %p44, %p45
      %p47 = scmp.ne.s32.totalorder %s36, %s39
      %p48 = scmp.eq.s32.totalorder %s19, 1
      %p49 = por %p47, %p48
      %p50 = scmp.ne.s32.totalorder %s39, %s40
      %p51 = scmp.eq.s32.totalorder %s19, 0
      %p52 = por %p50, %p51
      %p53 = scmp.ne.s32.totalorder %s39, %s40
      %p54 = scmp.eq.s32.totalorder %s20, 1
      %p55 = por %p53, %p54
      %p57 = scmp.ne.s32.totalorder %s40, %s56
      %p58 = scmp.eq.s32.totalorder %s20, 0
      %p59 = por %p57, %p58
      %s60 = ssub.s32 %s21, %s33
      %s61 = ssub.s32 %s22, %s29
      %s62 = sor.u32 %s60, %s61
      %p63 = scmp.eq.s32.totalorder %s62, 0
      %s65 = sadd.s32 %s64, 1
      %s66 = scalar_select %p63, %s64, %s65
      %p69 = pneg %p63
      %p70 = scmp.eq.s32.totalorder %s14, 1
      %p71 = por %p69, %p70
      %p72 = scmp.ne.s32.totalorder %s64, %s67
      %p73 = scmp.eq.s32.totalorder %s14, 0
      %p74 = por %p72, %p73
      %p75 = scmp.ne.s32.totalorder %s64, %s67
      %p76 = scmp.eq.s32.totalorder %s19, 1
      %p77 = por %p75, %p76
      %p78 = scmp.ne.s32.totalorder %s67, %s68
      %p79 = scmp.eq.s32.totalorder %s19, 0
      %p80 = por %p78, %p79
      %p81 = scmp.ne.s32.totalorder %s67, %s68
      %p82 = scmp.eq.s32.totalorder %s20, 1
      %p83 = por %p81, %p82
      %p85 = scmp.ne.s32.totalorder %s68, %s84
      %p86 = scmp.eq.s32.totalorder %s20, 0
      %p87 = por %p85, %p86
      %s88 = ssub.s32 %s21, %s33
      %s89 = ssub.s32 %s22, %s29
      %s90 = sor.u32 %s88, %s89
      %p91 = scmp.eq.s32.totalorder %s90, 0
      %s93 = sadd.s32 %s92, 1
      %s94 = scalar_select %p91, %s92, %s93
      %p97 = pneg %p91
      %p98 = scmp.eq.s32.totalorder %s14, 1
      %p99 = por %p97, %p98
      %p100 = scmp.ne.s32.totalorder %s92, %s95
      %p101 = scmp.eq.s32.totalorder %s14, 0
      %p102 = por %p100, %p101
      %p103 = scmp.ne.s32.totalorder %s92, %s95
      %p104 = scmp.eq.s32.totalorder %s19, 1
      %p105 = por %p103, %p104
      %p106 = scmp.ne.s32.totalorder %s95, %s96
      %p107 = scmp.eq.s32.totalorder %s19, 0
      %p108 = por %p106, %p107
      %p109 = scmp.ne.s32.totalorder %s95, %s96
      %p110 = scmp.eq.s32.totalorder %s20, 1
      %p111 = por %p109, %p110
      %p113 = scmp.ne.s32.totalorder %s96, %s112
      %p114 = scmp.eq.s32.totalorder %s20, 0
      %p115 = por %p113, %p114
      %p116 = scmp.le.s32.totalorder 1, %s14
      %p117 = scmp.lt.s32.totalorder %s14, 3
      %p118 = pnand %p116, %p117
      %p119 = pneg %p118
      // Predicated region
      $region9: #{tpu_custom_call.1} parent=5 // pred_check
        _
      $region10: #{tpu_custom_call.1} parent=5 // pred_check_branch
        %121 = sbr.rel (%p118) target = $region12
      $region11: #{tpu_custom_call.1} parent=5 // pred_region
        %s122 = ssub.s32 %s14, 1
      $region12: #{tpu_custom_call.1} parent=5 // pred_fallthru
        _
      %p123 = scmp.lt.s32.totalorder %s14, 2
      // Predicated region
      $region13: #{tpu_custom_call.1} parent=5 // pred_check
        %p124 = pneg %p123
      $region14: #{tpu_custom_call.1} parent=5 // pred_check_branch
        %126 = sbr.rel (%p124) target = $region16
      $region15: #{tpu_custom_call.1} parent=5 // pred_region
        // Predicated region
        $region17: #{tpu_custom_call.1} parent=15 // pred_check
          %p127 = pneg %p46
        $region18: #{tpu_custom_call.1} parent=15 // pred_check_branch
          %129 = sbr.rel (%p127) target = $region20
        $region19: #{tpu_custom_call.1} parent=15 // pred_region
          %p130 = scmp.lt.s32.totalorder %s21, 1
          %s131 = scalar_select %p130, %s21, 1
          %s132 = scalar_lea.vmem %s0, %s131
        $region20: #{tpu_custom_call.1} parent=15 // pred_fallthru
          _
        // Predicated region
        $region21: #{tpu_custom_call.1} parent=15 // pred_check
          %p133 = pneg %p74
        $region22: #{tpu_custom_call.1} parent=15 // pred_check_branch
          %135 = sbr.rel (%p133) target = $region24
        $region23: #{tpu_custom_call.1} parent=15 // pred_region
          %s136 = sand.u32 %s64, 1
          %s137 = scalar_lea.sflag [#allocation3], %s136
          %s138 = sand.u32 %s64, 1
          %s139 = smul.addr %s138, 8
          %s140 = scalar_lea.vmem [#allocation2], %s139
          %s142 = ssub.s32 128, 128
          %143 = vsyncadd %s137, %s142
          %s144 = sadd.s32 %s22, %s21
          %s145 = smul.addr %s144, 128
          %s146 = scalar_lea.hbm %s1, %s145
          %s148 = sshll.u32 %s140, 4
          %s149 = int_to_ptr.vmem [resolvable:$true] %s148
          %151 = dma.hbm_to_vmem [thread:$0]  %s146, 128, %s149, %s137
        $region24: #{tpu_custom_call.1} parent=15 // pred_fallthru
          _
      $region16: #{tpu_custom_call.1} parent=5 // pred_fallthru
        _
      %p152 = scmp.le.s32.totalorder 1, %s14
      %p153 = scmp.lt.s32.totalorder %s14, 3
      %p154 = pnand %p152, %p153
      %p155 = pneg %p154
      // Predicated region
      $region25: #{tpu_custom_call.1} parent=5 // pred_check
        _
      $region26: #{tpu_custom_call.1} parent=5 // pred_check_branch
        %157 = sbr.rel (%p154) target = $region28
      $region27: #{tpu_custom_call.1} parent=5 // pred_region
        %s158 = ssub.s32 %s14, 1
        %s159 = sand.u32 %s67, 1
        %s160 = scalar_lea.sflag [#allocation3], %s159
        %s161 = sand.u32 %s67, 1
        %s162 = smul.addr %s161, 8
        %s163 = scalar_lea.vmem [#allocation2], %s162
        // Predicated region
        $region29: #{tpu_custom_call.1} parent=27 // pred_check
          %p164 = pneg %p80
        $region30: #{tpu_custom_call.1} parent=27 // pred_check_branch
          %166 = sbr.rel (%p164) target = $region32
        $region31: #{tpu_custom_call.1} parent=27 // pred_region
          %167 = dma.done %s160, 128
        $region32: #{tpu_custom_call.1} parent=27 // pred_fallthru
          _
        %p168 = scmp.lt.s32.totalorder %s23, 1
        %s169 = scalar_select %p168, %s23, 1
        %s170 = scalar_lea.vmem %s0, %s169
        %p171 = pneg %p52
        %p172 = pneg %p49
        %s173 = sand.u32 %s67, 1
        %s174 = scalar_lea.sflag [#allocation3], %s173
        %s175 = sand.u32 %s67, 1
        %s176 = smul.addr %s175, 8
        %s177 = scalar_lea.vmem [#allocation2], %s176
        %p178 = pneg %p80
        %p179 = pneg %p77
        %p180 = pneg %p108
        %p181 = pneg %p105
        %s182 = sand.u32 %s95, 1
        %s183 = scalar_lea.sflag [#allocation4], %s182
        %s184 = sand.u32 %s95, 1
        %s185 = smul.addr %s184, 8
        %s186 = scalar_lea.vmem [#allocation5], %s185
        %p187 = scmp.lt.s32.totalorder %s23, 1
        %s188 = scalar_select %p187, %s23, 1
        %s189 = scalar_lea.vmem %s0, %s188
        %v190 = vld [vmem:[%s163] sm:$0xff]
        %v191 = vld [vmem:[%s189] sm:$0x1]
        %v193 = vlaneseq
        %v194 = vshrl.u32 %v193, 7
        %v195 = vsub.s32 0, %v194
        %v196 = vrot.slane %v191, %v195
        %197 = vset.pattern.permute.xlu0 0
        %198 = vperm.xlu0 %197, %v196
        %v199 = vpop.permute.xlu0 %198
        %v201 = vmul.f32 %v190, %v199
        %202 = vst [vmem:[%s186] sm:$0xff] %v201
        %s203 = sand.u32 %s95, 1
        %s204 = scalar_lea.sflag [#allocation4], %s203
        %s205 = sand.u32 %s95, 1
        %s206 = smul.addr %s205, 8
        %s207 = scalar_lea.vmem [#allocation5], %s206
        // Predicated region
        $region33: #{tpu_custom_call.1} parent=27 // pred_check
          %p208 = pneg %p105
        $region34: #{tpu_custom_call.1} parent=27 // pred_check_branch
          %210 = sbr.rel (%p208) target = $region36
        $region35: #{tpu_custom_call.1} parent=27 // pred_region
          %s212 = ssub.s32 128, 128
          %213 = vsyncadd %s204, %s212
          %s214 = sadd.s32 %s24, %s23
          %s215 = smul.addr %s214, 128
          %s216 = scalar_lea.hbm %s2, %s215
          %s218 = sshll.u32 %s207, 4
          %s219 = int_to_ptr.vmem [resolvable:$true] %s218
          %221 = dma.vmem_to_hbm [thread:$0]  %s219, 128, %s216, %s204
        $region36: #{tpu_custom_call.1} parent=27 // pred_fallthru
          _
      $region28: #{tpu_custom_call.1} parent=5 // pred_fallthru
        _
      %p222 = scmp.le.s32.totalorder 2, %s14
      // Predicated region
      $region37: #{tpu_custom_call.1} parent=5 // pred_check
        %p223 = pneg %p222
      $region38: #{tpu_custom_call.1} parent=5 // pred_check_branch
        %225 = sbr.rel (%p223) target = $region40
      $region39: #{tpu_custom_call.1} parent=5 // pred_region
        %s226 = ssub.s32 %s14, 2
        // Predicated region
        $region41: #{tpu_custom_call.1} parent=39 // pred_check
          %p227 = pneg %p111
        $region42: #{tpu_custom_call.1} parent=39 // pred_check_branch
          %229 = sbr.rel (%p227) target = $region44
        $region43: #{tpu_custom_call.1} parent=39 // pred_region
          %s230 = sand.u32 %s96, 1
          %s231 = scalar_lea.sflag [#allocation4], %s230
          %s232 = sand.u32 %s96, 1
          %s233 = smul.addr %s232, 8
          %s234 = scalar_lea.vmem [#allocation5], %s233
          %235 = dma.done %s231, 128
        $region44: #{tpu_custom_call.1} parent=39 // pred_fallthru
          _
      $region40: #{tpu_custom_call.1} parent=5 // pred_fallthru
        _
    $region6: #{tpu_custom_call.1} parent=1 // loop_footer
      %s18 = sadd.s32 1, %s14
    $region7: #{tpu_custom_call.1} parent=1 // loop_footer_branch
      %13 = sbr.rel target = $region3
    $region8: #{tpu_custom_call.1} parent=1 // loop_exit
      _
    %236 = vsyncpa [#allocation3], 1
    %s237 = scalar_lea.sflag [#allocation3], 1
    %238 = vsyncpa %s237, 1
    %239 = vsyncpa [#allocation4], 1
    %s240 = scalar_lea.sflag [#allocation4], 1
    %241 = vsyncpa %s240, 1

</llo_original>
